<compile_context>
chip_gen: v7x
topology: tpu7x:2x2x1
jax: 0.10.0
libtpu: 0.0.40
codegen_flags: <defaults>
</compile_context>

<pallas_src>
import jax
import jax.numpy as jnp
from jax import lax
from jax.experimental import pallas as pl
from jax.experimental.pallas import tpu as pltpu


def _round_up(v, m):
    return (v + m - 1) // m * m


def gfr_decoder_kernel(p_ref, w_ref, b_ref, gT_ref, beta_ref, a_ref, o_ref):
    # p_ref   : (tile_n, Kp)  bf16  im2col patches (zero padded, lane-dense)
    # w_ref   : (Kp, Cp)      bf16  conv weight in im2col layout (Cout padded)
    # b_ref   : (1, Cp)       f32   conv bias (pad = 0)
    # gT_ref  : (Cp, Cp)      f32   effective GDN gamma, transposed (pad = 0)
    # beta_ref: (1, Cp)       f32   effective GDN beta (pad = 1)
    # a_ref   : (1,)          f32   PReLU slope, in SMEM
    # o_ref   : (tile_n, Cp)  f32
    conv = jnp.dot(p_ref[...], w_ref[...], preferred_element_type=jnp.float32)
    conv = conv + b_ref[...]

    # GDN (inverse=False): norm_i = beta_i + sum_j gamma[i,j] * conv_j^2
    xsq = conv * conv
    norm = jnp.dot(xsq, gT_ref[...], preferred_element_type=jnp.float32)
    norm = norm + beta_ref[...]
    y = conv * lax.rsqrt(norm)

    # PReLU (single shared slope)
    a = a_ref[0]
    y = jnp.where(y >= 0.0, y, a * y)

    o_ref[...] = y.astype(o_ref.dtype)


def gfr_decoder_forward(x_nchw, w_oihw, bias, gamma_eff, beta_eff, prelu_a,
                        *, tile_n=256):
    """x_nchw: (B, Cin, H, W) float32.  Returns (B, Cout, H, W) float32."""
    B, Cin, H, W = x_nchw.shape
    Cout, Cin_w, K, K2 = w_oihw.shape
    assert Cin_w == Cin and K == K2
    assert K % 2 == 1, "'same' padding here requires an odd kernel size"
    pad = K // 2

    # ---- glue: NCHW -> NHWC, spatial zero pad, im2col (patches lane-dense) ----
    # NOTE: for very large Cin / images the im2col could instead be built
    # in-kernel from K*K shifted DMA views to avoid the K*K HBM blow-up.
    x_nhwc = jnp.transpose(x_nchw, (0, 2, 3, 1)).astype(jnp.float32)
    x_pad = jnp.pad(x_nhwc, ((0, 0), (pad, pad), (pad, pad), (0, 0)))
    taps = [x_pad[:, dy:dy + H, dx:dx + W, :]
            for dy in range(K) for dx in range(K)]
    patches = jnp.concatenate(taps, axis=-1)          # (B,H,W,K*K*Cin) (dy,dx,cin)
    KKC = K * K * Cin
    N = B * H * W
    patches = patches.reshape(N, KKC)

    Kp = _round_up(KKC, 128)                          # lane-dense contraction
    Cp = _round_up(Cout, 128)                         # lane-dense output channels
    tile_n = min(tile_n, _round_up(N, 8))
    Np = _round_up(N, tile_n)

    patches = jnp.pad(patches, ((0, Np - N), (0, Kp - KKC))).astype(jnp.bfloat16)

    # weights: OIHW -> (K,K,Cin,Cout) -> (K*K*Cin, Cout), pad, cast to bf16
    w2 = jnp.transpose(w_oihw, (2, 3, 1, 0)).reshape(KKC, Cout).astype(jnp.float32)
    w2 = jnp.pad(w2, ((0, Kp - KKC), (0, Cp - Cout))).astype(jnp.bfloat16)
    b2 = jnp.pad(bias.astype(jnp.float32).reshape(1, Cout),
                 ((0, 0), (0, Cp - Cout)))
    gT = jnp.pad(gamma_eff.T.astype(jnp.float32),
                 ((0, Cp - Cout), (0, Cp - Cout)))
    beta2 = jnp.pad(beta_eff.astype(jnp.float32).reshape(1, Cout),
                    ((0, 0), (0, Cp - Cout)), constant_values=1.0)
    a1 = jnp.asarray(prelu_a, jnp.float32).reshape(1)

    grid = (Np // tile_n,)
    cost = pl.CostEstimate(
        flops=int(2 * Np * Kp * Cp + 2 * Np * Cp * Cp + 6 * Np * Cp),
        transcendentals=int(Np * Cp),
        bytes_accessed=int(patches.size * 2 + w2.size * 2 + gT.size * 4
                           + 2 * Cp * 4 + Np * Cp * 4),
    )

    out = pl.pallas_call(
        gfr_decoder_kernel,
        out_shape=jax.ShapeDtypeStruct((Np, Cp), jnp.float32),
        grid_spec=pltpu.PrefetchScalarGridSpec(
            num_scalar_prefetch=0,
            grid=grid,
            in_specs=[
                pl.BlockSpec((tile_n, Kp), lambda i: (i, 0)),   # patches
                pl.BlockSpec((Kp, Cp), lambda i: (0, 0)),       # conv weight
                pl.BlockSpec((1, Cp), lambda i: (0, 0)),        # bias
                pl.BlockSpec((Cp, Cp), lambda i: (0, 0)),       # gamma^T
                pl.BlockSpec((1, Cp), lambda i: (0, 0)),        # beta
                pl.BlockSpec(memory_space=pltpu.MemorySpace.SMEM),  # prelu slope
            ],
            out_specs=pl.BlockSpec((tile_n, Cp), lambda i: (i, 0)),
        ),
        compiler_params=pltpu.CompilerParams(
            dimension_semantics=("parallel",)),
        cost_estimate=cost,
    )(patches, w2, b2, gT, beta2, a1)

    out = out[:N, :Cout].reshape(B, H, W, Cout)
    return jnp.transpose(out, (0, 3, 1, 2))


def init_params(key, Cin, Cout, K):
    """Deterministic synthetic parameters matching the module's shapes."""
    kw, kb = jax.random.split(key)
    w = jax.random.normal(kw, (Cout, Cin, K, K), jnp.float32) * 0.1   # OIHW
    b = jax.random.normal(kb, (Cout,), jnp.float32) * 0.01

    # GDN init (exactly as in GDN.build) + forward reparam (LowerBound = max)
    reparam_offset = 2.0 ** (-18)
    pedestal = reparam_offset ** 2
    beta_min = 1e-6
    beta_bound = (beta_min + pedestal) ** 0.5
    gamma_bound = reparam_offset
    gamma_init = 0.1
    beta_param = jnp.sqrt(jnp.ones((Cout,), jnp.float32) + pedestal)
    gamma_param = jnp.sqrt(gamma_init * jnp.eye(Cout, dtype=jnp.float32) + pedestal)
    beta_eff = jnp.maximum(beta_param, beta_bound) ** 2 - pedestal
    gamma_eff = jnp.maximum(gamma_param, gamma_bound) ** 2 - pedestal

    prelu_a = 0.25    # nn.PReLU() default single shared slope
    return w, b, gamma_eff, beta_eff, prelu_a


def reference_forward(x_nchw, w_oihw, bias, gamma_eff, beta_eff, prelu_a):
    conv = lax.conv_general_dilated(
        x_nchw, w_oihw, window_strides=(1, 1), padding='SAME',
        dimension_numbers=('NCHW', 'OIHW', 'NCHW'))
    conv = conv + bias[None, :, None, None]
    norm = jnp.einsum('ij,bjhw->bihw', gamma_eff, conv * conv)
    norm = norm + beta_eff[None, :, None, None]
    y = conv / jnp.sqrt(norm)
    return jnp.where(y >= 0.0, y, prelu_a * y)


if __name__ == "__main__":
    B, Cin, Cout, H, W, K = 2, 4, 8, 16, 16, 3   # stride=1 (required by 'same')

    key = jax.random.PRNGKey(0)
    kx, kp = jax.random.split(key)
    x = jax.random.normal(kx, (B, Cin, H, W), jnp.float32)
    w, b, gamma_eff, beta_eff, prelu_a = init_params(kp, Cin, Cout, K)

    # Round the conv operands to bf16 up front so the kernel (bf16 MXU path)
    # and the f32 reference see identical inputs -> tight tolerance remains valid.
    x_r = x.astype(jnp.bfloat16).astype(jnp.float32)
    w_r = w.astype(jnp.bfloat16).astype(jnp.float32)

    out = gfr_decoder_forward(x_r, w_r, b, gamma_eff, beta_eff, prelu_a)
    out = jax.block_until_ready(out)

    ref = jax.block_until_ready(
        reference_forward(x_r, w_r, b, gamma_eff, beta_eff, prelu_a))

    assert out.shape == (B, Cout, H, W)
    assert bool(jnp.allclose(out, ref, rtol=2e-3, atol=2e-3))
    print("KERNEL_OK")
</pallas_src>

<mosaic_0001>
module attributes {stable_mosaic.version = 11 : i64} {
  func.func @gfr_decoder_kernel(%arg0: i32, %arg1: memref<256x128xbf16, #tpu.memory_space<vmem>>, %arg2: memref<128x128xbf16, #tpu.memory_space<vmem>>, %arg3: memref<1x128xf32, #tpu.memory_space<vmem>>, %arg4: memref<128x128xf32, #tpu.memory_space<vmem>>, %arg5: memref<1x128xf32, #tpu.memory_space<vmem>>, %arg6: memref<1xf32, #tpu.memory_space<smem>>, %arg7: memref<256x128xf32, #tpu.memory_space<vmem>>) attributes {dimension_semantics = [#tpu.dimension_semantics<parallel>], iteration_bounds = array<i64: 2>, scalar_prefetch = 0 : i64, scratch_operands = 0 : i64, tpu.core_type = #tpu.core_type<tc>, window_params = [{transform_indices = @transform_0, window_bounds = array<i64: 256, 128>}, {pipeline_mode = #tpu.pipeline_mode<synchronous>, transform_indices = @transform_1, window_bounds = array<i64: 128, 128>}, {pipeline_mode = #tpu.pipeline_mode<synchronous>, transform_indices = @transform_2, window_bounds = array<i64: 1, 128>}, {pipeline_mode = #tpu.pipeline_mode<synchronous>, transform_indices = @transform_3, window_bounds = array<i64: 128, 128>}, {pipeline_mode = #tpu.pipeline_mode<synchronous>, transform_indices = @transform_4, window_bounds = array<i64: 1, 128>}, {transform_indices = @transform_5, window_bounds = array<i64: 1>}, {transform_indices = @transform_6, window_bounds = array<i64: 256, 128>}]} {
    %c0 = arith.constant 0 : index
    %c0_0 = arith.constant 0 : index
    %0 = vector.load %arg1[%c0, %c0_0] : memref<256x128xbf16, #tpu.memory_space<vmem>>, vector<256x128xbf16>
    %c0_1 = arith.constant 0 : index
    %c0_2 = arith.constant 0 : index
    %1 = vector.load %arg2[%c0_1, %c0_2] : memref<128x128xbf16, #tpu.memory_space<vmem>>, vector<128x128xbf16>
    %cst = arith.constant dense<0.000000e+00> : vector<256x128xf32>
    %2 = tpu.matmul %0, %1, %cst {dimension_numbers = #tpu.dot_dimension_numbers<[1], [0], [0], [1], [0, 0, 1, 1], [], []>} : vector<256x128xbf16>, vector<128x128xbf16>, vector<256x128xf32> -> vector<256x128xf32>
    %c0_3 = arith.constant 0 : index
    %c0_4 = arith.constant 0 : index
    %3 = vector.load %arg3[%c0_3, %c0_4] : memref<1x128xf32, #tpu.memory_space<vmem>>, vector<1x128xf32>
    %4 = vector.broadcast %3 : vector<1x128xf32> to vector<256x128xf32>
    %5 = arith.addf %2, %4 : vector<256x128xf32>
    %6 = arith.mulf %5, %5 : vector<256x128xf32>
    %c0_5 = arith.constant 0 : index
    %c0_6 = arith.constant 0 : index
    %7 = vector.load %arg4[%c0_5, %c0_6] : memref<128x128xf32, #tpu.memory_space<vmem>>, vector<128x128xf32>
    %cst_7 = arith.constant dense<0.000000e+00> : vector<256x128xf32>
    %8 = tpu.matmul %6, %7, %cst_7 {dimension_numbers = #tpu.dot_dimension_numbers<[1], [0], [0], [1], [0, 0, 1, 1], [], []>} : vector<256x128xf32>, vector<128x128xf32>, vector<256x128xf32> -> vector<256x128xf32>
    %c0_8 = arith.constant 0 : index
    %c0_9 = arith.constant 0 : index
    %9 = vector.load %arg5[%c0_8, %c0_9] : memref<1x128xf32, #tpu.memory_space<vmem>>, vector<1x128xf32>
    %10 = vector.broadcast %9 : vector<1x128xf32> to vector<256x128xf32>
    %11 = arith.addf %8, %10 : vector<256x128xf32>
    %12 = math.rsqrt %11 : vector<256x128xf32>
    %13 = arith.mulf %5, %12 : vector<256x128xf32>
    %c0_10 = arith.constant 0 : index
    %14 = memref.load %arg6[%c0_10] : memref<1xf32, #tpu.memory_space<smem>>
    %cst_11 = arith.constant 0.000000e+00 : f32
    %15 = vector.broadcast %cst_11 : f32 to vector<256x128xf32>
    %16 = arith.cmpf oge, %13, %15 : vector<256x128xf32>
    %17 = vector.broadcast %14 : f32 to vector<256x128xf32>
    %18 = arith.mulf %17, %13 : vector<256x128xf32>
    %19 = arith.select %16, %13, %18 : vector<256x128xi1>, vector<256x128xf32>
    %c0_12 = arith.constant 0 : index
    %c0_13 = arith.constant 0 : index
    %20 = vector.load %arg7[%c0_12, %c0_13] : memref<256x128xf32, #tpu.memory_space<vmem>>, vector<256x128xf32>
    tpu.vector_store %arg7[%c0_12, %c0_13], %19 {strides = array<i32>} : memref<256x128xf32, #tpu.memory_space<vmem>>, vector<256x128xf32>,
    return
  }
  func.func @transform_0(%arg0: i32) -> (i32, i32) {
    %c0_i32 = arith.constant 0 : i32
    %c0_i32_0 = arith.constant 0 : i32
    return %arg0, %c0_i32 : i32, i32
  }
  func.func @transform_1(%arg0: i32) -> (i32, i32) {
    %c0_i32 = arith.constant 0 : i32
    %c0_i32_0 = arith.constant 0 : i32
    %c0_i32_1 = arith.constant 0 : i32
    return %c0_i32, %c0_i32_0 : i32, i32
  }
  func.func @transform_2(%arg0: i32) -> (i32, i32) {
    %c0_i32 = arith.constant 0 : i32
    %c0_i32_0 = arith.constant 0 : i32
    %c0_i32_1 = arith.constant 0 : i32
    return %c0_i32, %c0_i32_0 : i32, i32
  }
  func.func @transform_3(%arg0: i32) -> (i32, i32) {
    %c0_i32 = arith.constant 0 : i32
    %c0_i32_0 = arith.constant 0 : i32
    %c0_i32_1 = arith.constant 0 : i32
    return %c0_i32, %c0_i32_0 : i32, i32
  }
  func.func @transform_4(%arg0: i32) -> (i32, i32) {
    %c0_i32 = arith.constant 0 : i32
    %c0_i32_0 = arith.constant 0 : i32
    %c0_i32_1 = arith.constant 0 : i32
    return %c0_i32, %c0_i32_0 : i32, i32
  }
  func.func @transform_5(%arg0: i32) -> i32 {
    %c0_i32 = arith.constant 0 : i32
    %c0_i32_0 = arith.constant 0 : i32
    return %c0_i32 : i32
  }
  func.func @transform_6(%arg0: i32) -> (i32, i32) {
    %c0_i32 = arith.constant 0 : i32
    %c0_i32_0 = arith.constant 0 : i32
    return %arg0, %c0_i32 : i32, i32
  }
}

</mosaic_0001>

<llo_original>
// kernel: tpu_custom_call.1
$region0: #{tpu_custom_call.1}
  #allocation0 [shape = 'u32[]', space=smem, size = 0x4, offset = 0x4, fixed_abs, tag = 'smem constant byte address 0x4 - core index']
  #allocation1 [shape = 'u32[144,128]{1,0:T(1,128)}', space=vmem, size = 0x12000, scoped, tag = 'internal scratch']
  #allocation2 [shape = 'f32[1]{0:T(128)S(6)}', space=smem, size = 0x200, scoped, tag = 'scoped memory for tpu_custom_call.1']
  %s0 = inlined_call_operand.hbm [shape: bf16[512,128], index: 0, kind: input, shape index: {}]
  %s1 = inlined_call_operand.hbm [shape: bf16[128,128], index: 1, kind: input, shape index: {}]
  %s2 = inlined_call_operand.vmem [shape: f32[1,128], index: 2, kind: input, shape index: {}]
  %s3 = inlined_call_operand.hbm [shape: f32[128,128], index: 3, kind: input, shape index: {}]
  %s4 = inlined_call_operand.vmem [shape: f32[1,128], index: 4, kind: input, shape index: {}]
  %s5 = inlined_call_operand.<no memory space> [shape: f32[1], index: 5, kind: input, shape index: {}]
  %s6 = inlined_call_operand.hbm [shape: f32[512,128], index: 6, kind: output, shape index: {}]
  %s7 = sld [smem:[#allocation0]]
  $region69: #{tpu_custom_call.1} parent=0
    _
  %s9 = ssub.s32 1, %s7
  %s10 = scalar_select 0, %s9, %s7
  %11 = sst [smem:[#allocation2]] %s5
  $region1: #{tpu_custom_call.1} parent=0
    #allocation3 [shape = 'u8[131072]{0}', space=vmem, size = 0x20000, scoped, tag = 'input window, operand 0']
    #allocation4 [shape = 's32[2]{0}', space=sflag, size = 0x8, scoped, tag = 'scoped memory for tpu_custom_call.1']
    #allocation5 [shape = 's32[2]{0}', space=sflag, size = 0x8, scoped, tag = 'scoped memory for tpu_custom_call.1']
    #allocation6 [shape = 'u8[32768]{0}', space=vmem, size = 0x8000, scoped, tag = 'input window, operand 1, single buffered']
    #allocation7 [shape = 's32[1]{0}', space=sflag, size = 0x4, scoped, tag = 'scoped memory for tpu_custom_call.1']
    #allocation8 [shape = 'u8[65536]{0}', space=vmem, size = 0x10000, scoped, tag = 'input window, operand 3, single buffered']
    #allocation9 [shape = 'u8[262144]{0}', space=vmem, size = 0x40000, scoped, tag = 'output window, operand 0']
    %12 = vsyncpa [#allocation4], 0
    %s13 = scalar_lea.sflag [#allocation4], 1
    %14 = vsyncpa %s13, 0
    %15 = vsyncpa [#allocation7], 0
    %16 = vsyncpa [#allocation5], 0
    %s17 = scalar_lea.sflag [#allocation5], 1
    %18 = vsyncpa %s17, 0
    loop: start=0, step=1, limit=4
    $region2: #{tpu_custom_call.1} parent=1 // loop_pre_header
      _
    $region3: #{tpu_custom_call.1} parent=1 // loop_header
      %s20 = sphi 0, %s24
      %p21 = scmp.ge.s32.totalorder %s20, 4
      %s30 = sphi 0, %s32
      %s33 = sphi 0, %s30
      %s34 = sphi 0, %s33
      %s50 = sphi 0, %s34
      %s54 = sphi 0, %s54
      %s56 = sphi 0, %s54
      %s57 = sphi 0, %s56
      %s71 = sphi 0, %s57
      %s75 = sphi 0, %s75
      %s77 = sphi 0, %s75
      %s78 = sphi 0, %s77
      %s92 = sphi 0, %s78
      %s96 = sphi 0, %s96
      %s98 = sphi 0, %s96
      %s99 = sphi 0, %s98
      %s113 = sphi 0, %s99
      %s117 = sphi 0, %s117
      %s119 = sphi 0, %s117
      %s120 = sphi 0, %s119
      %s134 = sphi 0, %s120
      %s138 = sphi 0, %s138
      %s140 = sphi 0, %s138
      %s141 = sphi 0, %s140
      %s155 = sphi 0, %s141
      %s161 = sphi 0, %s163
      %s164 = sphi 0, %s161
      %s165 = sphi 0, %s164
      %s181 = sphi 0, %s165
    $region4: #{tpu_custom_call.1} parent=1 // loop_header_branch
      %23 = sbr.rel (%p21) target = $region8
    $region5: #{tpu_custom_call.1} parent=1 // loop_body
      %s25 = ssub.s32 %s20, 1
      %s26 = ssub.s32 %s20, 2
      %s27 = sadd.s32 %s20, 1
      %s28 = ssub.s32 %s20, %s27
      %p29 = scmp.eq.s32.totalorder %s28, 0
      %s31 = sadd.s32 %s30, 1
      %s32 = scalar_select %p29, %s30, %s31
      %p35 = pneg %p29
      %p36 = scmp.eq.s32.totalorder %s20, 1
      %p37 = por %p35, %p36
      %p38 = scmp.ne.s32.totalorder %s30, %s33
      %p39 = scmp.eq.s32.totalorder %s20, 0
      %p40 = por %p38, %p39
      %p41 = scmp.ne.s32.totalorder %s30, %s33
      %p42 = scmp.eq.s32.totalorder %s25, 1
      %p43 = por %p41, %p42
      %p44 = scmp.ne.s32.totalorder %s33, %s34
      %p45 = scmp.eq.s32.totalorder %s25, 0
      %p46 = por %p44, %p45
      %p47 = scmp.ne.s32.totalorder %s33, %s34
      %p48 = scmp.eq.s32.totalorder %s26, 1
      %p49 = por %p47, %p48
      %p51 = scmp.ne.s32.totalorder %s34, %s50
      %p52 = scmp.eq.s32.totalorder %s26, 0
      %p53 = por %p51, %p52
      %s55 = sadd.s32 %s54, 1
      %p58 = scmp.eq.s32.totalorder %s20, 1
      %p59 = scmp.ne.s32.totalorder %s54, %s56
      %p60 = scmp.eq.s32.totalorder %s20, 0
      %p61 = por %p59, %p60
      %p62 = scmp.ne.s32.totalorder %s54, %s56
      %p63 = scmp.eq.s32.totalorder %s25, 1
      %p64 = por %p62, %p63
      %p65 = scmp.ne.s32.totalorder %s56, %s57
      %p66 = scmp.eq.s32.totalorder %s25, 0
      %p67 = por %p65, %p66
      %p68 = scmp.ne.s32.totalorder %s56, %s57
      %p69 = scmp.eq.s32.totalorder %s26, 1
      %p70 = por %p68, %p69
      %p72 = scmp.ne.s32.totalorder %s57, %s71
      %p73 = scmp.eq.s32.totalorder %s26, 0
      %p74 = por %p72, %p73
      %s76 = sadd.s32 %s75, 1
      %p79 = scmp.eq.s32.totalorder %s20, 1
      %p80 = scmp.ne.s32.totalorder %s75, %s77
      %p81 = scmp.eq.s32.totalorder %s20, 0
      %p82 = por %p80, %p81
      %p83 = scmp.ne.s32.totalorder %s75, %s77
      %p84 = scmp.eq.s32.totalorder %s25, 1
      %p85 = por %p83, %p84
      %p86 = scmp.ne.s32.totalorder %s77, %s78
      %p87 = scmp.eq.s32.totalorder %s25, 0
      %p88 = por %p86, %p87
      %p89 = scmp.ne.s32.totalorder %s77, %s78
      %p90 = scmp.eq.s32.totalorder %s26, 1
      %p91 = por %p89, %p90
      %p93 = scmp.ne.s32.totalorder %s78, %s92
      %p94 = scmp.eq.s32.totalorder %s26, 0
      %p95 = por %p93, %p94
      %s97 = sadd.s32 %s96, 1
      %p100 = scmp.eq.s32.totalorder %s20, 1
      %p101 = scmp.ne.s32.totalorder %s96, %s98
      %p102 = scmp.eq.s32.totalorder %s20, 0
      %p103 = por %p101, %p102
      %p104 = scmp.ne.s32.totalorder %s96, %s98
      %p105 = scmp.eq.s32.totalorder %s25, 1
      %p106 = por %p104, %p105
      %p107 = scmp.ne.s32.totalorder %s98, %s99
      %p108 = scmp.eq.s32.totalorder %s25, 0
      %p109 = por %p107, %p108
      %p110 = scmp.ne.s32.totalorder %s98, %s99
      %p111 = scmp.eq.s32.totalorder %s26, 1
      %p112 = por %p110, %p111
      %p114 = scmp.ne.s32.totalorder %s99, %s113
      %p115 = scmp.eq.s32.totalorder %s26, 0
      %p116 = por %p114, %p115
      %s118 = sadd.s32 %s117, 1
      %p121 = scmp.eq.s32.totalorder %s20, 1
      %p122 = scmp.ne.s32.totalorder %s117, %s119
      %p123 = scmp.eq.s32.totalorder %s20, 0
      %p124 = por %p122, %p123
      %p125 = scmp.ne.s32.totalorder %s117, %s119
      %p126 = scmp.eq.s32.totalorder %s25, 1
      %p127 = por %p125, %p126
      %p128 = scmp.ne.s32.totalorder %s119, %s120
      %p129 = scmp.eq.s32.totalorder %s25, 0
      %p130 = por %p128, %p129
      %p131 = scmp.ne.s32.totalorder %s119, %s120
      %p132 = scmp.eq.s32.totalorder %s26, 1
      %p133 = por %p131, %p132
      %p135 = scmp.ne.s32.totalorder %s120, %s134
      %p136 = scmp.eq.s32.totalorder %s26, 0
      %p137 = por %p135, %p136
      %s139 = sadd.s32 %s138, 1
      %p142 = scmp.eq.s32.totalorder %s20, 1
      %p143 = scmp.ne.s32.totalorder %s138, %s140
      %p144 = scmp.eq.s32.totalorder %s20, 0
      %p145 = por %p143, %p144
      %p146 = scmp.ne.s32.totalorder %s138, %s140
      %p147 = scmp.eq.s32.totalorder %s25, 1
      %p148 = por %p146, %p147
      %p149 = scmp.ne.s32.totalorder %s140, %s141
      %p150 = scmp.eq.s32.totalorder %s25, 0
      %p151 = por %p149, %p150
      %p152 = scmp.ne.s32.totalorder %s140, %s141
      %p153 = scmp.eq.s32.totalorder %s26, 1
      %p154 = por %p152, %p153
      %p156 = scmp.ne.s32.totalorder %s141, %s155
      %p157 = scmp.eq.s32.totalorder %s26, 0
      %p158 = por %p156, %p157
      %s159 = ssub.s32 %s20, %s27
      %p160 = scmp.eq.s32.totalorder %s159, 0
      %s162 = sadd.s32 %s161, 1
      %s163 = scalar_select %p160, %s161, %s162
      %p166 = pneg %p160
      %p167 = scmp.eq.s32.totalorder %s20, 1
      %p168 = por %p166, %p167
      %p169 = scmp.ne.s32.totalorder %s161, %s164
      %p170 = scmp.eq.s32.totalorder %s20, 0
      %p171 = por %p169, %p170
      %p172 = scmp.ne.s32.totalorder %s161, %s164
      %p173 = scmp.eq.s32.totalorder %s25, 1
      %p174 = por %p172, %p173
      %p175 = scmp.ne.s32.totalorder %s164, %s165
      %p176 = scmp.eq.s32.totalorder %s25, 0
      %p177 = por %p175, %p176
      %p178 = scmp.ne.s32.totalorder %s164, %s165
      %p179 = scmp.eq.s32.totalorder %s26, 1
      %p180 = por %p178, %p179
      %p182 = scmp.ne.s32.totalorder %s165, %s181
      %p183 = scmp.eq.s32.totalorder %s26, 0
      %p184 = por %p182, %p183
      %p185 = scmp.le.s32.totalorder 1, %s20
      %p186 = scmp.lt.s32.totalorder %s20, 3
      %p187 = pnand %p185, %p186
      %p188 = pneg %p187
      // Predicated region
      $region9: #{tpu_custom_call.1} parent=5 // pred_check
        _
      $region10: #{tpu_custom_call.1} parent=5 // pred_check_branch
        %190 = sbr.rel (%p187) target = $region12
      $region11: #{tpu_custom_call.1} parent=5 // pred_region
        %s191 = ssub.s32 %s20, 1
        // Predicated region
        $region13: #{tpu_custom_call.1} parent=11 // pred_check
          %p192 = pneg %p67
        $region14: #{tpu_custom_call.1} parent=11 // pred_check_branch
          %194 = sbr.rel (%p192) target = $region16
        $region15: #{tpu_custom_call.1} parent=11 // pred_region
          %s196 = ssub.s32 1024, 1024
          %197 = vsyncadd [#allocation7], %s196
          %s198 = sshll.u32 [#allocation6], 4
          %s199 = int_to_ptr.vmem [resolvable:$true] %s198
          %204 = dma.hbm_to_vmem [thread:$0]  %s1, 1024, %s199, [#allocation7], 64, 64, 4
        $region16: #{tpu_custom_call.1} parent=11 // pred_fallthru
          _
        // Predicated region
        $region17: #{tpu_custom_call.1} parent=11 // pred_check
          %p205 = pneg %p88
        $region18: #{tpu_custom_call.1} parent=11 // pred_check_branch
          %207 = sbr.rel (%p205) target = $region20
        $region19: #{tpu_custom_call.1} parent=11 // pred_region
          _
        $region20: #{tpu_custom_call.1} parent=11 // pred_fallthru
          _
        // Predicated region
        $region21: #{tpu_custom_call.1} parent=11 // pred_check
          %p208 = pneg %p109
        $region22: #{tpu_custom_call.1} parent=11 // pred_check_branch
          %210 = sbr.rel (%p208) target = $region24
        $region23: #{tpu_custom_call.1} parent=11 // pred_region
          %s212 = ssub.s32 2048, 2048
          %213 = vsyncadd [#allocation7], %s212
          %s214 = sshll.u32 [#allocation8], 4
          %s215 = int_to_ptr.vmem [resolvable:$true] %s214
          %220 = dma.hbm_to_vmem [thread:$0]  %s3, 2048, %s215, [#allocation7], 128, 128, 8
        $region24: #{tpu_custom_call.1} parent=11 // pred_fallthru
          _
        // Predicated region
        $region25: #{tpu_custom_call.1} parent=11 // pred_check
          %p221 = pneg %p130
        $region26: #{tpu_custom_call.1} parent=11 // pred_check_branch
          %223 = sbr.rel (%p221) target = $region28
        $region27: #{tpu_custom_call.1} parent=11 // pred_region
          _
        $region28: #{tpu_custom_call.1} parent=11 // pred_fallthru
          _
        // Predicated region
        $region29: #{tpu_custom_call.1} parent=11 // pred_check
          %p224 = pneg %p151
        $region30: #{tpu_custom_call.1} parent=11 // pred_check_branch
          %226 = sbr.rel (%p224) target = $region32
        $region31: #{tpu_custom_call.1} parent=11 // pred_region
          _
        $region32: #{tpu_custom_call.1} parent=11 // pred_fallthru
          _
      $region12: #{tpu_custom_call.1} parent=5 // pred_fallthru
        _
      %p227 = scmp.lt.s32.totalorder %s20, 2
      // Predicated region
      $region33: #{tpu_custom_call.1} parent=5 // pred_check
        %p228 = pneg %p227
      $region34: #{tpu_custom_call.1} parent=5 // pred_check_branch
        %230 = sbr.rel (%p228) target = $region36
      $region35: #{tpu_custom_call.1} parent=5 // pred_region
        // Predicated region
        $region37: #{tpu_custom_call.1} parent=35 // pred_check
          %p231 = pneg %p40
        $region38: #{tpu_custom_call.1} parent=35 // pred_check_branch
          %233 = sbr.rel (%p231) target = $region40
        $region39: #{tpu_custom_call.1} parent=35 // pred_region
          %s234 = sand.u32 %s30, 1
          %s235 = scalar_lea.sflag [#allocation4], %s234
          %s236 = sand.u32 %s30, 1
          %s237 = smul.addr %s236, 128
          %s238 = scalar_lea.vmem [#allocation3], %s237
          %s239 = smul.u32 32, %s20
          %s241 = ssub.s32 2048, 2048
          %242 = vsyncadd %s235, %s241
          %s243 = smul.addr %s239, 64
          %s244 = scalar_lea.hbm %s0, %s243
          %s245 = sshll.u32 %s238, 4
          %s246 = int_to_ptr.vmem [resolvable:$true] %s245
          %251 = dma.hbm_to_vmem [thread:$0]  %s244, 2048, %s246, %s235, 64, 64, 4
        $region40: #{tpu_custom_call.1} parent=35 // pred_fallthru
          _
      $region36: #{tpu_custom_call.1} parent=5 // pred_fallthru
        _
      %p252 = scmp.le.s32.totalorder 1, %s20
      %p253 = scmp.lt.s32.totalorder %s20, 3
      %p254 = pnand %p252, %p253
      %p255 = pneg %p254
      // Predicated region
      $region41: #{tpu_custom_call.1} parent=5 // pred_check
        _
      $region42: #{tpu_custom_call.1} parent=5 // pred_check_branch
        %257 = sbr.rel (%p254) target = $region44
      $region43: #{tpu_custom_call.1} parent=5 // pred_region
        %s258 = ssub.s32 %s20, 1
        %s259 = sand.u32 %s33, 1
        %s260 = scalar_lea.sflag [#allocation4], %s259
        %s261 = sand.u32 %s33, 1
        %s262 = smul.addr %s261, 128
        %s263 = scalar_lea.vmem [#allocation3], %s262
        // Predicated region
        $region45: #{tpu_custom_call.1} parent=43 // pred_check
          %p264 = pneg %p46
        $region46: #{tpu_custom_call.1} parent=43 // pred_check_branch
          %266 = sbr.rel (%p264) target = $region48
        $region47: #{tpu_custom_call.1} parent=43 // pred_region
          %267 = dma.done %s260, 2048
        $region48: #{tpu_custom_call.1} parent=43 // pred_fallthru
          _
        // Predicated region
        $region49: #{tpu_custom_call.1} parent=43 // pred_check
          %p268 = pneg %p67
        $region50: #{tpu_custom_call.1} parent=43 // pred_check_branch
          %270 = sbr.rel (%p268) target = $region52
        $region51: #{tpu_custom_call.1} parent=43 // pred_region
          %271 = dma.done [#allocation7], 1024
        $region52: #{tpu_custom_call.1} parent=43 // pred_fallthru
          _
        // Predicated region
        $region53: #{tpu_custom_call.1} parent=43 // pred_check
          %p272 = pneg %p109
        $region54: #{tpu_custom_call.1} parent=43 // pred_check_branch
          %274 = sbr.rel (%p272) target = $region56
        $region55: #{tpu_custom_call.1} parent=43 // pred_region
          %275 = dma.done [#allocation7], 2048
        $region56: #{tpu_custom_call.1} parent=43 // pred_fallthru
          _
        %s276 = sand.u32 %s33, 1
        %s277 = scalar_lea.sflag [#allocation4], %s276
        %s278 = sand.u32 %s33, 1
        %s279 = smul.addr %s278, 128
        %s280 = scalar_lea.vmem [#allocation3], %s279
        %p281 = pneg %p46
        %p282 = pneg %p43
        %p283 = pneg %p67
        %p284 = pneg %p64
        %p285 = pneg %p88
        %p286 = pneg %p85
        %p287 = pneg %p109
        %p288 = pneg %p106
        %p289 = pneg %p130
        %p290 = pneg %p127
        %p291 = pneg %p151
        %p292 = pneg %p148
        %p293 = pneg %p177
        %p294 = pneg %p174
        %s295 = sand.u32 %s164, 1
        %s296 = scalar_lea.sflag [#allocation5], %s295
        %s297 = sand.u32 %s164, 1
        %s298 = smul.addr %s297, 256
        %s299 = scalar_lea.vmem [#allocation9], %s298
        %s300 = smul.u32 32, %s25
        %s301 = smul.u32 32, %s25
        %v303 = vld [vmem:[%s263] sm:$0xf]
        %v304 = vld [vmem:[%s263 + $0x4] sm:$0xf]
        %v305 = vld [vmem:[%s263 + $0x8] sm:$0xf]
        %v306 = vld [vmem:[%s263 + $0xc] sm:$0xf]
        %v307 = vld [vmem:[%s263 + $0x10] sm:$0xf]
        %v308 = vld [vmem:[%s263 + $0x14] sm:$0xf]
        %v309 = vld [vmem:[%s263 + $0x18] sm:$0xf]
        %v310 = vld [vmem:[%s263 + $0x1c] sm:$0xf]
        %v311 = vld [vmem:[%s263 + $0x20] sm:$0xf]
        %v312 = vld [vmem:[%s263 + $0x24] sm:$0xf]
        %v313 = vld [vmem:[%s263 + $0x28] sm:$0xf]
        %v314 = vld [vmem:[%s263 + $0x2c] sm:$0xf]
        %v315 = vld [vmem:[%s263 + $0x30] sm:$0xf]
        %v316 = vld [vmem:[%s263 + $0x34] sm:$0xf]
        %v317 = vld [vmem:[%s263 + $0x38] sm:$0xf]
        %v318 = vld [vmem:[%s263 + $0x3c] sm:$0xf]
        %v319 = vld [vmem:[%s263 + $0x40] sm:$0xf]
        %v320 = vld [vmem:[%s263 + $0x44] sm:$0xf]
        %v321 = vld [vmem:[%s263 + $0x48] sm:$0xf]
        %v322 = vld [vmem:[%s263 + $0x4c] sm:$0xf]
        %v323 = vld [vmem:[%s263 + $0x50] sm:$0xf]
        %v324 = vld [vmem:[%s263 + $0x54] sm:$0xf]
        %v325 = vld [vmem:[%s263 + $0x58] sm:$0xf]
        %v326 = vld [vmem:[%s263 + $0x5c] sm:$0xf]
        %v327 = vld [vmem:[%s263 + $0x60] sm:$0xf]
        %v328 = vld [vmem:[%s263 + $0x64] sm:$0xf]
        %v329 = vld [vmem:[%s263 + $0x68] sm:$0xf]
        %v330 = vld [vmem:[%s263 + $0x6c] sm:$0xf]
        %v331 = vld [vmem:[%s263 + $0x70] sm:$0xf]
        %v332 = vld [vmem:[%s263 + $0x74] sm:$0xf]
        %v333 = vld [vmem:[%s263 + $0x78] sm:$0xf]
        %v334 = vld [vmem:[%s263 + $0x7c] sm:$0xf]
        %v335 = vld [vmem:[#allocation6] sm:$0xf]
        %v336 = vld [vmem:[#allocation6 + $0x4] sm:$0xf]
        %v337 = vld [vmem:[#allocation6 + $0x8] sm:$0xf]
        %v338 = vld [vmem:[#allocation6 + $0xc] sm:$0xf]
        %v339 = vld [vmem:[#allocation6 + $0x10] sm:$0xf]
        %v340 = vld [vmem:[#allocation6 + $0x14] sm:$0xf]
        %v341 = vld [vmem:[#allocation6 + $0x18] sm:$0xf]
        %v342 = vld [vmem:[#allocation6 + $0x1c] sm:$0xf]
        %v343 = vld [vmem:[#allocation6 + $0x20] sm:$0xf]
        %v344 = vld [vmem:[#allocation6 + $0x24] sm:$0xf]
        %v345 = vld [vmem:[#allocation6 + $0x28] sm:$0xf]
        %v346 = vld [vmem:[#allocation6 + $0x2c] sm:$0xf]
        %v347 = vld [vmem:[#allocation6 + $0x30] sm:$0xf]
        %v348 = vld [vmem:[#allocation6 + $0x34] sm:$0xf]
        %v349 = vld [vmem:[#allocation6 + $0x38] sm:$0xf]
        %v350 = vld [vmem:[#allocation6 + $0x3c] sm:$0xf]
        %v351 = vld [vmem:[%s2] sm:$0x1]
        %v353 = vlaneseq
        %v354 = vshrl.u32 %v353, 7
        %v355 = vsub.s32 0, %v354
        %v356 = vrot.slane %v351, %v355
        %v390 = vunpack.c.l.b16 %v303
        %v391 = vunpack.c.l.b16 %v304
        %v392 = vunpack.c.l.b16 %v305
        %v393 = vunpack.c.l.b16 %v306
        %v394 = vunpack.c.l.b16 %v307
        %v395 = vunpack.c.l.b16 %v308
        %v396 = vunpack.c.l.b16 %v309
        %v397 = vunpack.c.l.b16 %v310
        %v398 = vunpack.c.l.b16 %v311
        %v399 = vunpack.c.l.b16 %v312
        %v400 = vunpack.c.l.b16 %v313
        %v401 = vunpack.c.l.b16 %v314
        %v402 = vunpack.c.l.b16 %v315
        %v403 = vunpack.c.l.b16 %v316
        %v404 = vunpack.c.l.b16 %v317
        %v405 = vunpack.c.l.b16 %v318
        %v406 = vunpack.c.l.b16 %v319
        %v407 = vunpack.c.l.b16 %v320
        %v408 = vunpack.c.l.b16 %v321
        %v409 = vunpack.c.l.b16 %v322
        %v410 = vunpack.c.l.b16 %v323
        %v411 = vunpack.c.l.b16 %v324
        %v412 = vunpack.c.l.b16 %v325
        %v413 = vunpack.c.l.b16 %v326
        %v414 = vunpack.c.l.b16 %v327
        %v415 = vunpack.c.l.b16 %v328
        %v416 = vunpack.c.l.b16 %v329
        %v417 = vunpack.c.l.b16 %v330
        %v418 = vunpack.c.l.b16 %v331
        %v419 = vunpack.c.l.b16 %v332
        %v420 = vunpack.c.l.b16 %v333
        %v421 = vunpack.c.l.b16 %v334
        %v422 = vpack.c.b16 %v391, %v390
        %v423 = vpack.c.b16 %v393, %v392
        %v424 = vpack.c.b16 %v395, %v394
        %v425 = vpack.c.b16 %v397, %v396
        %v426 = vpack.c.b16 %v399, %v398
        %v427 = vpack.c.b16 %v401, %v400
        %v428 = vpack.c.b16 %v403, %v402
        %v429 = vpack.c.b16 %v405, %v404
        %v430 = vpack.c.b16 %v407, %v406
        %v431 = vpack.c.b16 %v409, %v408
        %v432 = vpack.c.b16 %v411, %v410
        %v433 = vpack.c.b16 %v413, %v412
        %v434 = vpack.c.b16 %v415, %v414
        %v435 = vpack.c.b16 %v417, %v416
        %v436 = vpack.c.b16 %v419, %v418
        %v437 = vpack.c.b16 %v421, %v420
        %v470 = vunpack.c.l.b16 %v335
        %v471 = vunpack.c.l.b16 %v336
        %v472 = vunpack.c.l.b16 %v337
        %v473 = vunpack.c.l.b16 %v338
        %v474 = vunpack.c.l.b16 %v339
        %v475 = vunpack.c.l.b16 %v340
        %v476 = vunpack.c.l.b16 %v341
        %v477 = vunpack.c.l.b16 %v342
        %v478 = vunpack.c.l.b16 %v343
        %v479 = vunpack.c.l.b16 %v344
        %v480 = vunpack.c.l.b16 %v345
        %v481 = vunpack.c.l.b16 %v346
        %v482 = vunpack.c.l.b16 %v347
        %v483 = vunpack.c.l.b16 %v348
        %v484 = vunpack.c.l.b16 %v349
        %v485 = vunpack.c.l.b16 %v350
        %v486 = vpack.c.b16 %v471, %v470
        %v487 = vpack.c.b16 %v473, %v472
        %v488 = vpack.c.b16 %v475, %v474
        %v489 = vpack.c.b16 %v477, %v476
        %v490 = vpack.c.b16 %v479, %v478
        %v491 = vpack.c.b16 %v481, %v480
        %v492 = vpack.c.b16 %v483, %v482
        %v493 = vpack.c.b16 %v485, %v484
        %502 = vmatprep.subr.bf16.mxu0 0
        %503 = vmatpush1.bf16.msra.mxu0 %v486
        %504 = vmatprep.subr.bf16.mxu0 0
        %505 = vmatpush1.bf16.msra.mxu0 %v487
        %506 = vmatprep.subr.bf16.mxu0 0
        %507 = vmatpush1.bf16.msra.mxu0 %v488
        %508 = vmatprep.subr.bf16.mxu0 0
        %509 = vmatpush1.bf16.msra.mxu0 %v489
        %510 = vmatprep.subr.bf16.mxu0 0
        %511 = vmatpush1.bf16.msra.mxu0 %v490
        %512 = vmatprep.subr.bf16.mxu0 0
        %513 = vmatpush1.bf16.msra.mxu0 %v491
        %514 = vmatprep.subr.bf16.mxu0 0
        %515 = vmatpush1.bf16.msra.mxu0 %v492
        %516 = vmatprep.subr.bf16.mxu0 0
        %517 = vmatpush1.bf16.msra.mxu0 %v493
        %518 = vmatprep.subr.bf16.mxu0 0
        %519 = vmatpush1.bf16.msra.mxu0 0
        %520 = vmatprep.subr.bf16.mxu0 0
        %521 = vmatpush1.bf16.msra.mxu0 0
        %522 = vmatprep.subr.bf16.mxu0 0
        %523 = vmatpush1.bf16.msra.mxu0 0
        %524 = vmatprep.subr.bf16.mxu0 0
        %525 = vmatpush1.bf16.msra.mxu0 0
        %526 = vmatprep.subr.bf16.mxu0 0
        %527 = vmatpush1.bf16.msra.mxu0 0
        %528 = vmatprep.subr.bf16.mxu0 0
        %529 = vmatpush1.bf16.msra.mxu0 0
        %530 = vmatprep.subr.bf16.mxu0 0
        %531 = vmatpush1.bf16.msra.mxu0 0
        %532 = vmatprep.subr.bf16.mxu0 0
        %533 = vmatpush1.bf16.msra.mxu0 0
        %534 = vmatprep.mubr.bf16.mxu0 0
        %535 = vmatmul.mubr.bf16.gmra.mrb[0].mxu0 %v422
        %v536 = vpop.f32.mrb[0].mxu0
        %v537 = vadd.f32 %v356, %v536
        %v538 = vpop.f32.mrb[0].mxu0
        %v539 = vpop.f32.mrb[0].mxu0
        %v540 = vadd.f32 %v356, %v539
        %v541 = vpop.f32.mrb[0].mxu0
        %542 = vmatprep.mubr.bf16.mxu0 0
        %543 = vmatmul.mubr.bf16.gmra.mrb[0].mxu0 %v423
        %v544 = vpop.f32.mrb[0].mxu0
        %v545 = vadd.f32 %v356, %v544
        %v546 = vpop.f32.mrb[0].mxu0
        %v547 = vpop.f32.mrb[0].mxu0
        %v548 = vadd.f32 %v356, %v547
        %v549 = vpop.f32.mrb[0].mxu0
        %550 = vmatprep.mubr.bf16.mxu0 0
        %551 = vmatmul.mubr.bf16.gmra.mrb[0].mxu0 %v424
        %v552 = vpop.f32.mrb[0].mxu0
        %v553 = vadd.f32 %v356, %v552
        %v554 = vpop.f32.mrb[0].mxu0
        %v555 = vpop.f32.mrb[0].mxu0
        %v556 = vadd.f32 %v356, %v555
        %v557 = vpop.f32.mrb[0].mxu0
        %558 = vmatprep.mubr.bf16.mxu0 0
        %559 = vmatmul.mubr.bf16.gmra.mrb[0].mxu0 %v425
        %v560 = vpop.f32.mrb[0].mxu0
        %v561 = vadd.f32 %v356, %v560
        %v562 = vpop.f32.mrb[0].mxu0
        %v563 = vpop.f32.mrb[0].mxu0
        %v564 = vadd.f32 %v356, %v563
        %v565 = vpop.f32.mrb[0].mxu0
        %566 = vmatprep.mubr.bf16.mxu0 0
        %567 = vmatmul.mubr.bf16.gmra.mrb[0].mxu0 %v426
        %v568 = vpop.f32.mrb[0].mxu0
        %v569 = vadd.f32 %v356, %v568
        %v570 = vpop.f32.mrb[0].mxu0
        %v571 = vpop.f32.mrb[0].mxu0
        %v572 = vadd.f32 %v356, %v571
        %v573 = vpop.f32.mrb[0].mxu0
        %574 = vmatprep.mubr.bf16.mxu0 0
        %575 = vmatmul.mubr.bf16.gmra.mrb[0].mxu0 %v427
        %v576 = vpop.f32.mrb[0].mxu0
        %v577 = vadd.f32 %v356, %v576
        %v578 = vpop.f32.mrb[0].mxu0
        %v579 = vpop.f32.mrb[0].mxu0
        %v580 = vadd.f32 %v356, %v579
        %v581 = vpop.f32.mrb[0].mxu0
        %582 = vmatprep.mubr.bf16.mxu0 0
        %583 = vmatmul.mubr.bf16.gmra.mrb[0].mxu0 %v428
        %v584 = vpop.f32.mrb[0].mxu0
        %v585 = vadd.f32 %v356, %v584
        %v586 = vpop.f32.mrb[0].mxu0
        %v587 = vpop.f32.mrb[0].mxu0
        %v588 = vadd.f32 %v356, %v587
        %v589 = vpop.f32.mrb[0].mxu0
        %590 = vmatprep.mubr.bf16.mxu0 0
        %591 = vmatmul.mubr.bf16.gmra.mrb[0].mxu0 %v429
        %v592 = vpop.f32.mrb[0].mxu0
        %v593 = vadd.f32 %v356, %v592
        %v594 = vpop.f32.mrb[0].mxu0
        %v595 = vpop.f32.mrb[0].mxu0
        %v596 = vadd.f32 %v356, %v595
        %v597 = vpop.f32.mrb[0].mxu0
        %598 = vmatprep.mubr.bf16.mxu0 0
        %599 = vmatmul.mubr.bf16.gmra.mrb[0].mxu0 %v430
        %v600 = vpop.f32.mrb[0].mxu0
        %v601 = vadd.f32 %v356, %v600
        %v602 = vpop.f32.mrb[0].mxu0
        %v603 = vpop.f32.mrb[0].mxu0
        %v604 = vadd.f32 %v356, %v603
        %v605 = vpop.f32.mrb[0].mxu0
        %606 = vmatprep.mubr.bf16.mxu0 0
        %607 = vmatmul.mubr.bf16.gmra.mrb[0].mxu0 %v431
        %v608 = vpop.f32.mrb[0].mxu0
        %v609 = vadd.f32 %v356, %v608
        %v610 = vpop.f32.mrb[0].mxu0
        %v611 = vpop.f32.mrb[0].mxu0
        %v612 = vadd.f32 %v356, %v611
        %v613 = vpop.f32.mrb[0].mxu0
        %614 = vmatprep.mubr.bf16.mxu0 0
        %615 = vmatmul.mubr.bf16.gmra.mrb[0].mxu0 %v432
        %v616 = vpop.f32.mrb[0].mxu0
        %v617 = vadd.f32 %v356, %v616
        %v618 = vpop.f32.mrb[0].mxu0
        %v619 = vpop.f32.mrb[0].mxu0
        %v620 = vadd.f32 %v356, %v619
        %v621 = vpop.f32.mrb[0].mxu0
        %622 = vmatprep.mubr.bf16.mxu0 0
        %623 = vmatmul.mubr.bf16.gmra.mrb[0].mxu0 %v433
        %v624 = vpop.f32.mrb[0].mxu0
        %v625 = vadd.f32 %v356, %v624
        %v626 = vpop.f32.mrb[0].mxu0
        %v627 = vpop.f32.mrb[0].mxu0
        %v628 = vadd.f32 %v356, %v627
        %v629 = vpop.f32.mrb[0].mxu0
        %630 = vmatprep.mubr.bf16.mxu0 0
        %631 = vmatmul.mubr.bf16.gmra.mrb[0].mxu0 %v434
        %v632 = vpop.f32.mrb[0].mxu0
        %v633 = vadd.f32 %v356, %v632
        %v634 = vpop.f32.mrb[0].mxu0
        %v635 = vpop.f32.mrb[0].mxu0
        %v636 = vadd.f32 %v356, %v635
        %v637 = vpop.f32.mrb[0].mxu0
        %638 = vmatprep.mubr.bf16.mxu0 0
        %639 = vmatmul.mubr.bf16.gmra.mrb[0].mxu0 %v435
        %v640 = vpop.f32.mrb[0].mxu0
        %v641 = vadd.f32 %v356, %v640
        %v642 = vpop.f32.mrb[0].mxu0
        %v643 = vpop.f32.mrb[0].mxu0
        %v644 = vadd.f32 %v356, %v643
        %v645 = vpop.f32.mrb[0].mxu0
        %646 = vmatprep.mubr.bf16.mxu0 0
        %647 = vmatmul.mubr.bf16.gmra.mrb[0].mxu0 %v436
        %v648 = vpop.f32.mrb[0].mxu0
        %v649 = vadd.f32 %v356, %v648
        %v650 = vpop.f32.mrb[0].mxu0
        %v651 = vpop.f32.mrb[0].mxu0
        %v652 = vadd.f32 %v356, %v651
        %v653 = vpop.f32.mrb[0].mxu0
        %654 = vmatprep.mubr.bf16.mxu0 0
        %655 = vmatmul.mubr.bf16.gmra.mrb[0].mxu0 %v437
        %v656 = vpop.f32.mrb[0].mxu0
        %v657 = vadd.f32 %v356, %v656
        %v658 = vpop.f32.mrb[0].mxu0
        %v659 = vpop.f32.mrb[0].mxu0
        %v660 = vadd.f32 %v356, %v659
        %v661 = vpop.f32.mrb[0].mxu0
        %662 = vdwg.mxu0
        %v663 = vmul.f32 %v537, %v537
        %v664 = vmul.f32 %v540, %v540
        %v665 = vmul.f32 %v545, %v545
        %v666 = vmul.f32 %v548, %v548
        %v667 = vmul.f32 %v553, %v553
        %v668 = vmul.f32 %v556, %v556
        %v669 = vmul.f32 %v561, %v561
        %v670 = vmul.f32 %v564, %v564
        %v671 = vmul.f32 %v569, %v569
        %v672 = vmul.f32 %v572, %v572
        %v673 = vmul.f32 %v577, %v577
        %v674 = vmul.f32 %v580, %v580
        %v675 = vmul.f32 %v585, %v585
        %v676 = vmul.f32 %v588, %v588
        %v677 = vmul.f32 %v593, %v593
        %v678 = vmul.f32 %v596, %v596
        %v679 = vmul.f32 %v601, %v601
        %v680 = vmul.f32 %v604, %v604
        %v681 = vmul.f32 %v609, %v609
        %v682 = vmul.f32 %v612, %v612
        %v683 = vmul.f32 %v617, %v617
        %v684 = vmul.f32 %v620, %v620
        %v685 = vmul.f32 %v625, %v625
        %v686 = vmul.f32 %v628, %v628
        %v687 = vmul.f32 %v633, %v633
        %v688 = vmul.f32 %v636, %v636
        %v689 = vmul.f32 %v641, %v641
        %v690 = vmul.f32 %v644, %v644
        %v691 = vmul.f32 %v649, %v649
        %v692 = vmul.f32 %v652, %v652
        %v693 = vmul.f32 %v657, %v657
        %v694 = vmul.f32 %v660, %v660
        %v695 = vld [vmem:[#allocation8] sm:$0xff]
        %v696 = vld [vmem:[#allocation8 + $0x8] sm:$0xff]
        %v697 = vld [vmem:[#allocation8 + $0x10] sm:$0xff]
        %v698 = vld [vmem:[#allocation8 + $0x18] sm:$0xff]
        %v699 = vld [vmem:[#allocation8 + $0x20] sm:$0xff]
        %v700 = vld [vmem:[#allocation8 + $0x28] sm:$0xff]
        %v701 = vld [vmem:[#allocation8 + $0x30] sm:$0xff]
        %v702 = vld [vmem:[#allocation8 + $0x38] sm:$0xff]
        %v703 = vld [vmem:[#allocation8 + $0x40] sm:$0xff]
        %v704 = vld [vmem:[#allocation8 + $0x48] sm:$0xff]
        %v705 = vld [vmem:[#allocation8 + $0x50] sm:$0xff]
        %v706 = vld [vmem:[#allocation8 + $0x58] sm:$0xff]
        %v707 = vld [vmem:[#allocation8 + $0x60] sm:$0xff]
        %v708 = vld [vmem:[#allocation8 + $0x68] sm:$0xff]
        %v709 = vld [vmem:[#allocation8 + $0x70] sm:$0xff]
        %v710 = vld [vmem:[#allocation8 + $0x78] sm:$0xff]
        %v711 = vld [vmem:[%s4] sm:$0x1]
        %v713 = vlaneseq
        %v714 = vshrl.u32 %v713, 7
        %v715 = vsub.s32 0, %v714
        %v716 = vrot.slane %v711, %v715
        %718 = vmatprep.subr.mxu0 0.0
        %719 = vmatpush1.msra.mxu0 %v695
        %720 = vmatprep.subr.mxu0 0.0
        %721 = vmatpush1.msra.mxu0 %v696
        %722 = vmatprep.subr.mxu0 0.0
        %723 = vmatpush1.msra.mxu0 %v697
        %724 = vmatprep.subr.mxu0 0.0
        %725 = vmatpush1.msra.mxu0 %v698
        %726 = vmatprep.subr.mxu0 0.0
        %727 = vmatpush1.msra.mxu0 %v699
        %728 = vmatprep.subr.mxu0 0.0
        %729 = vmatpush1.msra.mxu0 %v700
        %730 = vmatprep.subr.mxu0 0.0
        %731 = vmatpush1.msra.mxu0 %v701
        %732 = vmatprep.subr.mxu0 0.0
        %733 = vmatpush1.msra.mxu0 %v702
        %734 = vmatprep.subr.mxu0 0.0
        %735 = vmatpush1.msra.mxu0 %v703
        %736 = vmatprep.subr.mxu0 0.0
        %737 = vmatpush1.msra.mxu0 %v704
        %738 = vmatprep.subr.mxu0 0.0
        %739 = vmatpush1.msra.mxu0 %v705
        %740 = vmatprep.subr.mxu0 0.0
        %741 = vmatpush1.msra.mxu0 %v706
        %742 = vmatprep.subr.mxu0 0.0
        %743 = vmatpush1.msra.mxu0 %v707
        %744 = vmatprep.subr.mxu0 0.0
        %745 = vmatpush1.msra.mxu0 %v708
        %746 = vmatprep.subr.mxu0 0.0
        %747 = vmatpush1.msra.mxu0 %v709
        %748 = vmatprep.subr.mxu0 0.0
        %749 = vmatpush1.msra.mxu0 %v710
        %750 = vmatprep.subr.mxu0 0.0
        %751 = vmatpush1.msra.mxu0 0.0
        %752 = vmatprep.subr.mxu0 0.0
        %753 = vmatpush1.msra.mxu0 0.0
        %754 = vmatprep.subr.mxu0 0.0
        %755 = vmatpush1.msra.mxu0 0.0
        %756 = vmatprep.subr.mxu0 0.0
        %757 = vmatpush1.msra.mxu0 0.0
        %758 = vmatprep.subr.mxu0 0.0
        %759 = vmatpush1.msra.mxu0 0.0
        %760 = vmatprep.subr.mxu0 0.0
        %761 = vmatpush1.msra.mxu0 0.0
        %762 = vmatprep.subr.mxu0 0.0
        %763 = vmatpush1.msra.mxu0 0.0
        %764 = vmatprep.subr.mxu0 0.0
        %765 = vmatpush1.msra.mxu0 0.0
        %766 = vmatprep.subr.mxu0 0.0
        %767 = vmatpush1.msra.mxu0 0.0
        %768 = vmatprep.subr.mxu0 0.0
        %769 = vmatpush1.msra.mxu0 0.0
        %770 = vmatprep.subr.mxu0 0.0
        %771 = vmatpush1.msra.mxu0 0.0
        %772 = vmatprep.subr.mxu0 0.0
        %773 = vmatpush1.msra.mxu0 0.0
        %774 = vmatprep.subr.mxu0 0.0
        %775 = vmatpush1.msra.mxu0 0.0
        %776 = vmatprep.subr.mxu0 0.0
        %777 = vmatpush1.msra.mxu0 0.0
        %778 = vmatprep.subr.mxu0 0.0
        %779 = vmatpush1.msra.mxu0 0.0
        %780 = vmatprep.subr.mxu0 0.0
        %781 = vmatpush1.msra.mxu0 0.0
        %782 = vmatprep.mubr.f32.mxu0 0.0
        %783 = vmatmul.mubr.f32.gmra.mrb[0].mxu0 %v663
        %v784 = vpop.f32.mrb[0].mxu0
        %v785 = vadd.f32 %v716, %v784
        %v786 = vpop.f32.mrb[0].mxu0
        %787 = vmatprep.mubr.f32.mxu0 0.0
        %788 = vmatmul.mubr.f32.gmra.mrb[0].mxu0 %v664
        %v789 = vpop.f32.mrb[0].mxu0
        %v790 = vadd.f32 %v716, %v789
        %v791 = vpop.f32.mrb[0].mxu0
        %792 = vmatprep.mubr.f32.mxu0 0.0
        %793 = vmatmul.mubr.f32.gmra.mrb[0].mxu0 %v665
        %v794 = vpop.f32.mrb[0].mxu0
        %v795 = vadd.f32 %v716, %v794
        %v796 = vpop.f32.mrb[0].mxu0
        %797 = vmatprep.mubr.f32.mxu0 0.0
        %798 = vmatmul.mubr.f32.gmra.mrb[0].mxu0 %v666
        %v799 = vpop.f32.mrb[0].mxu0
        %v800 = vadd.f32 %v716, %v799
        %v801 = vpop.f32.mrb[0].mxu0
        %802 = vmatprep.mubr.f32.mxu0 0.0
        %803 = vmatmul.mubr.f32.gmra.mrb[0].mxu0 %v667
        %v804 = vpop.f32.mrb[0].mxu0
        %v805 = vadd.f32 %v716, %v804
        %v806 = vpop.f32.mrb[0].mxu0
        %807 = vmatprep.mubr.f32.mxu0 0.0
        %808 = vmatmul.mubr.f32.gmra.mrb[0].mxu0 %v668
        %v809 = vpop.f32.mrb[0].mxu0
        %v810 = vadd.f32 %v716, %v809
        %v811 = vpop.f32.mrb[0].mxu0
        %812 = vmatprep.mubr.f32.mxu0 0.0
        %813 = vmatmul.mubr.f32.gmra.mrb[0].mxu0 %v669
        %v814 = vpop.f32.mrb[0].mxu0
        %v815 = vadd.f32 %v716, %v814
        %v816 = vpop.f32.mrb[0].mxu0
        %817 = vmatprep.mubr.f32.mxu0 0.0
        %818 = vmatmul.mubr.f32.gmra.mrb[0].mxu0 %v670
        %v819 = vpop.f32.mrb[0].mxu0
        %v820 = vadd.f32 %v716, %v819
        %v821 = vpop.f32.mrb[0].mxu0
        %822 = vmatprep.mubr.f32.mxu0 0.0
        %823 = vmatmul.mubr.f32.gmra.mrb[0].mxu0 %v671
        %v824 = vpop.f32.mrb[0].mxu0
        %v825 = vadd.f32 %v716, %v824
        %v826 = vpop.f32.mrb[0].mxu0
        %827 = vmatprep.mubr.f32.mxu0 0.0
        %828 = vmatmul.mubr.f32.gmra.mrb[0].mxu0 %v672
        %v829 = vpop.f32.mrb[0].mxu0
        %v830 = vadd.f32 %v716, %v829
        %v831 = vpop.f32.mrb[0].mxu0
        %832 = vmatprep.mubr.f32.mxu0 0.0
        %833 = vmatmul.mubr.f32.gmra.mrb[0].mxu0 %v673
        %v834 = vpop.f32.mrb[0].mxu0
        %v835 = vadd.f32 %v716, %v834
        %v836 = vpop.f32.mrb[0].mxu0
        %837 = vmatprep.mubr.f32.mxu0 0.0
        %838 = vmatmul.mubr.f32.gmra.mrb[0].mxu0 %v674
        %v839 = vpop.f32.mrb[0].mxu0
        %v840 = vadd.f32 %v716, %v839
        %v841 = vpop.f32.mrb[0].mxu0
        %842 = vmatprep.mubr.f32.mxu0 0.0
        %843 = vmatmul.mubr.f32.gmra.mrb[0].mxu0 %v675
        %v844 = vpop.f32.mrb[0].mxu0
        %v845 = vadd.f32 %v716, %v844
        %v846 = vpop.f32.mrb[0].mxu0
        %847 = vmatprep.mubr.f32.mxu0 0.0
        %848 = vmatmul.mubr.f32.gmra.mrb[0].mxu0 %v676
        %v849 = vpop.f32.mrb[0].mxu0
        %v850 = vadd.f32 %v716, %v849
        %v851 = vpop.f32.mrb[0].mxu0
        %852 = vmatprep.mubr.f32.mxu0 0.0
        %853 = vmatmul.mubr.f32.gmra.mrb[0].mxu0 %v677
        %v854 = vpop.f32.mrb[0].mxu0
        %v855 = vadd.f32 %v716, %v854
        %v856 = vpop.f32.mrb[0].mxu0
        %857 = vmatprep.mubr.f32.mxu0 0.0
        %858 = vmatmul.mubr.f32.gmra.mrb[0].mxu0 %v678
        %v859 = vpop.f32.mrb[0].mxu0
        %v860 = vadd.f32 %v716, %v859
        %v861 = vpop.f32.mrb[0].mxu0
        %862 = vmatprep.mubr.f32.mxu0 0.0
        %863 = vmatmul.mubr.f32.gmra.mrb[0].mxu0 %v679
        %v864 = vpop.f32.mrb[0].mxu0
        %v865 = vadd.f32 %v716, %v864
        %v866 = vpop.f32.mrb[0].mxu0
        %867 = vmatprep.mubr.f32.mxu0 0.0
        %868 = vmatmul.mubr.f32.gmra.mrb[0].mxu0 %v680
        %v869 = vpop.f32.mrb[0].mxu0
        %v870 = vadd.f32 %v716, %v869
        %v871 = vpop.f32.mrb[0].mxu0
        %872 = vmatprep.mubr.f32.mxu0 0.0
        %873 = vmatmul.mubr.f32.gmra.mrb[0].mxu0 %v681
        %v874 = vpop.f32.mrb[0].mxu0
        %v875 = vadd.f32 %v716, %v874
        %v876 = vpop.f32.mrb[0].mxu0
        %877 = vmatprep.mubr.f32.mxu0 0.0
        %878 = vmatmul.mubr.f32.gmra.mrb[0].mxu0 %v682
        %v879 = vpop.f32.mrb[0].mxu0
        %v880 = vadd.f32 %v716, %v879
        %v881 = vpop.f32.mrb[0].mxu0
        %882 = vmatprep.mubr.f32.mxu0 0.0
        %883 = vmatmul.mubr.f32.gmra.mrb[0].mxu0 %v683
        %v884 = vpop.f32.mrb[0].mxu0
        %v885 = vadd.f32 %v716, %v884
        %v886 = vpop.f32.mrb[0].mxu0
        %887 = vmatprep.mubr.f32.mxu0 0.0
        %888 = vmatmul.mubr.f32.gmra.mrb[0].mxu0 %v684
        %v889 = vpop.f32.mrb[0].mxu0
        %v890 = vadd.f32 %v716, %v889
        %v891 = vpop.f32.mrb[0].mxu0
        %892 = vmatprep.mubr.f32.mxu0 0.0
        %893 = vmatmul.mubr.f32.gmra.mrb[0].mxu0 %v685
        %v894 = vpop.f32.mrb[0].mxu0
        %v895 = vadd.f32 %v716, %v894
        %v896 = vpop.f32.mrb[0].mxu0
        %897 = vmatprep.mubr.f32.mxu0 0.0
        %898 = vmatmul.mubr.f32.gmra.mrb[0].mxu0 %v686
        %v899 = vpop.f32.mrb[0].mxu0
        %v900 = vadd.f32 %v716, %v899
        %v901 = vpop.f32.mrb[0].mxu0
        %902 = vmatprep.mubr.f32.mxu0 0.0
        %903 = vmatmul.mubr.f32.gmra.mrb[0].mxu0 %v687
        %v904 = vpop.f32.mrb[0].mxu0
        %v905 = vadd.f32 %v716, %v904
        %v906 = vpop.f32.mrb[0].mxu0
        %907 = vmatprep.mubr.f32.mxu0 0.0
        %908 = vmatmul.mubr.f32.gmra.mrb[0].mxu0 %v688
        %v909 = vpop.f32.mrb[0].mxu0
        %v910 = vadd.f32 %v716, %v909
        %v911 = vpop.f32.mrb[0].mxu0
        %912 = vmatprep.mubr.f32.mxu0 0.0
        %913 = vmatmul.mubr.f32.gmra.mrb[0].mxu0 %v689
        %v914 = vpop.f32.mrb[0].mxu0
        %v915 = vadd.f32 %v716, %v914
        %v916 = vpop.f32.mrb[0].mxu0
        %917 = vmatprep.mubr.f32.mxu0 0.0
        %918 = vmatmul.mubr.f32.gmra.mrb[0].mxu0 %v690
        %v919 = vpop.f32.mrb[0].mxu0
        %v920 = vadd.f32 %v716, %v919
        %v921 = vpop.f32.mrb[0].mxu0
        %922 = vmatprep.mubr.f32.mxu0 0.0
        %923 = vmatmul.mubr.f32.gmra.mrb[0].mxu0 %v691
        %v924 = vpop.f32.mrb[0].mxu0
        %v925 = vadd.f32 %v716, %v924
        %v926 = vpop.f32.mrb[0].mxu0
        %927 = vmatprep.mubr.f32.mxu0 0.0
        %928 = vmatmul.mubr.f32.gmra.mrb[0].mxu0 %v692
        %v929 = vpop.f32.mrb[0].mxu0
        %v930 = vadd.f32 %v716, %v929
        %v931 = vpop.f32.mrb[0].mxu0
        %932 = vmatprep.mubr.f32.mxu0 0.0
        %933 = vmatmul.mubr.f32.gmra.mrb[0].mxu0 %v693
        %v934 = vpop.f32.mrb[0].mxu0
        %v935 = vadd.f32 %v716, %v934
        %v936 = vpop.f32.mrb[0].mxu0
        %937 = vmatprep.mubr.f32.mxu0 0.0
        %938 = vmatmul.mubr.f32.gmra.mrb[0].mxu0 %v694
        %v939 = vpop.f32.mrb[0].mxu0
        %v940 = vadd.f32 %v716, %v939
        %v941 = vpop.f32.mrb[0].mxu0
        %942 = vdwg.mxu0
        %v943 = vrsqrt.pop %v785
        %v944 = vrsqrt.pop %v790
        %v945 = vrsqrt.pop %v795
        %v946 = vrsqrt.pop %v800
        %v947 = vrsqrt.pop %v805
        %v948 = vrsqrt.pop %v810
        %v949 = vrsqrt.pop %v815
        %v950 = vrsqrt.pop %v820
        %v951 = vrsqrt.pop %v825
        %v952 = vrsqrt.pop %v830
        %v953 = vrsqrt.pop %v835
        %v954 = vrsqrt.pop %v840
        %v955 = vrsqrt.pop %v845
        %v956 = vrsqrt.pop %v850
        %v957 = vrsqrt.pop %v855
        %v958 = vrsqrt.pop %v860
        %v959 = vrsqrt.pop %v865
        %v960 = vrsqrt.pop %v870
        %v961 = vrsqrt.pop %v875
        %v962 = vrsqrt.pop %v880
        %v963 = vrsqrt.pop %v885
        %v964 = vrsqrt.pop %v890
        %v965 = vrsqrt.pop %v895
        %v966 = vrsqrt.pop %v900
        %v967 = vrsqrt.pop %v905
        %v968 = vrsqrt.pop %v910
        %v969 = vrsqrt.pop %v915
        %v970 = vrsqrt.pop %v920
        %v971 = vrsqrt.pop %v925
        %v972 = vrsqrt.pop %v930
        %v973 = vrsqrt.pop %v935
        %v974 = vrsqrt.pop %v940
        %v975 = vmul.f32 %v537, %v943
        %v976 = vmul.f32 %v540, %v944
        %v977 = vmul.f32 %v545, %v945
        %v978 = vmul.f32 %v548, %v946
        %v979 = vmul.f32 %v553, %v947
        %v980 = vmul.f32 %v556, %v948
        %v981 = vmul.f32 %v561, %v949
        %v982 = vmul.f32 %v564, %v950
        %v983 = vmul.f32 %v569, %v951
        %v984 = vmul.f32 %v572, %v952
        %v985 = vmul.f32 %v577, %v953
        %v986 = vmul.f32 %v580, %v954
        %v987 = vmul.f32 %v585, %v955
        %v988 = vmul.f32 %v588, %v956
        %v989 = vmul.f32 %v593, %v957
        %v990 = vmul.f32 %v596, %v958
        %v991 = vmul.f32 %v601, %v959
        %v992 = vmul.f32 %v604, %v960
        %v993 = vmul.f32 %v609, %v961
        %v994 = vmul.f32 %v612, %v962
        %v995 = vmul.f32 %v617, %v963
        %v996 = vmul.f32 %v620, %v964
        %v997 = vmul.f32 %v625, %v965
        %v998 = vmul.f32 %v628, %v966
        %v999 = vmul.f32 %v633, %v967
        %v1000 = vmul.f32 %v636, %v968
        %v1001 = vmul.f32 %v641, %v969
        %v1002 = vmul.f32 %v644, %v970
        %v1003 = vmul.f32 %v649, %v971
        %v1004 = vmul.f32 %v652, %v972
        %v1005 = vmul.f32 %v657, %v973
        %v1006 = vmul.f32 %v660, %v974
        %s1007 = sld [smem:[#allocation2]]
        %vm1008 = vcmp.ge.f32.partialorder %v975, 0.0
        %vm1009 = vcmp.ge.f32.partialorder %v976, 0.0
        %vm1010 = vcmp.ge.f32.partialorder %v977, 0.0
        %vm1011 = vcmp.ge.f32.partialorder %v978, 0.0
        %vm1012 = vcmp.ge.f32.partialorder %v979, 0.0
        %vm1013 = vcmp.ge.f32.partialorder %v980, 0.0
        %vm1014 = vcmp.ge.f32.partialorder %v981, 0.0
        %vm1015 = vcmp.ge.f32.partialorder %v982, 0.0
        %vm1016 = vcmp.ge.f32.partialorder %v983, 0.0
        %vm1017 = vcmp.ge.f32.partialorder %v984, 0.0
        %vm1018 = vcmp.ge.f32.partialorder %v985, 0.0
        %vm1019 = vcmp.ge.f32.partialorder %v986, 0.0
        %vm1020 = vcmp.ge.f32.partialorder %v987, 0.0
        %vm1021 = vcmp.ge.f32.partialorder %v988, 0.0
        %vm1022 = vcmp.ge.f32.partialorder %v989, 0.0
        %vm1023 = vcmp.ge.f32.partialorder %v990, 0.0
        %vm1024 = vcmp.ge.f32.partialorder %v991, 0.0
        %vm1025 = vcmp.ge.f32.partialorder %v992, 0.0
        %vm1026 = vcmp.ge.f32.partialorder %v993, 0.0
        %vm1027 = vcmp.ge.f32.partialorder %v994, 0.0
        %vm1028 = vcmp.ge.f32.partialorder %v995, 0.0
        %vm1029 = vcmp.ge.f32.partialorder %v996, 0.0
        %vm1030 = vcmp.ge.f32.partialorder %v997, 0.0
        %vm1031 = vcmp.ge.f32.partialorder %v998, 0.0
        %vm1032 = vcmp.ge.f32.partialorder %v999, 0.0
        %vm1033 = vcmp.ge.f32.partialorder %v1000, 0.0
        %vm1034 = vcmp.ge.f32.partialorder %v1001, 0.0
        %vm1035 = vcmp.ge.f32.partialorder %v1002, 0.0
        %vm1036 = vcmp.ge.f32.partialorder %v1003, 0.0
        %vm1037 = vcmp.ge.f32.partialorder %v1004, 0.0
        %vm1038 = vcmp.ge.f32.partialorder %v1005, 0.0
        %vm1039 = vcmp.ge.f32.partialorder %v1006, 0.0
        %v1040 = vstv %s1007
        %v1041 = vmul.f32 %v1040, %v975
        %v1042 = vmul.f32 %v1040, %v976
        %v1043 = vmul.f32 %v1040, %v977
        %v1044 = vmul.f32 %v1040, %v978
        %v1045 = vmul.f32 %v1040, %v979
        %v1046 = vmul.f32 %v1040, %v980
        %v1047 = vmul.f32 %v1040, %v981
        %v1048 = vmul.f32 %v1040, %v982
        %v1049 = vmul.f32 %v1040, %v983
        %v1050 = vmul.f32 %v1040, %v984
        %v1051 = vmul.f32 %v1040, %v985
        %v1052 = vmul.f32 %v1040, %v986
        %v1053 = vmul.f32 %v1040, %v987
        %v1054 = vmul.f32 %v1040, %v988
        %v1055 = vmul.f32 %v1040, %v989
        %v1056 = vmul.f32 %v1040, %v990
        %v1057 = vmul.f32 %v1040, %v991
        %v1058 = vmul.f32 %v1040, %v992
        %v1059 = vmul.f32 %v1040, %v993
        %v1060 = vmul.f32 %v1040, %v994
        %v1061 = vmul.f32 %v1040, %v995
        %v1062 = vmul.f32 %v1040, %v996
        %v1063 = vmul.f32 %v1040, %v997
        %v1064 = vmul.f32 %v1040, %v998
        %v1065 = vmul.f32 %v1040, %v999
        %v1066 = vmul.f32 %v1040, %v1000
        %v1067 = vmul.f32 %v1040, %v1001
        %v1068 = vmul.f32 %v1040, %v1002
        %v1069 = vmul.f32 %v1040, %v1003
        %v1070 = vmul.f32 %v1040, %v1004
        %v1071 = vmul.f32 %v1040, %v1005
        %v1072 = vmul.f32 %v1040, %v1006
        %v1073 = vsel %vm1008, %v975, %v1041
        %v1074 = vsel %vm1009, %v976, %v1042
        %v1075 = vsel %vm1010, %v977, %v1043
        %v1076 = vsel %vm1011, %v978, %v1044
        %v1077 = vsel %vm1012, %v979, %v1045
        %v1078 = vsel %vm1013, %v980, %v1046
        %v1079 = vsel %vm1014, %v981, %v1047
        %v1080 = vsel %vm1015, %v982, %v1048
        %v1081 = vsel %vm1016, %v983, %v1049
        %v1082 = vsel %vm1017, %v984, %v1050
        %v1083 = vsel %vm1018, %v985, %v1051
        %v1084 = vsel %vm1019, %v986, %v1052
        %v1085 = vsel %vm1020, %v987, %v1053
        %v1086 = vsel %vm1021, %v988, %v1054
        %v1087 = vsel %vm1022, %v989, %v1055
        %v1088 = vsel %vm1023, %v990, %v1056
        %v1089 = vsel %vm1024, %v991, %v1057
        %v1090 = vsel %vm1025, %v992, %v1058
        %v1091 = vsel %vm1026, %v993, %v1059
        %v1092 = vsel %vm1027, %v994, %v1060
        %v1093 = vsel %vm1028, %v995, %v1061
        %v1094 = vsel %vm1029, %v996, %v1062
        %v1095 = vsel %vm1030, %v997, %v1063
        %v1096 = vsel %vm1031, %v998, %v1064
        %v1097 = vsel %vm1032, %v999, %v1065
        %v1098 = vsel %vm1033, %v1000, %v1066
        %v1099 = vsel %vm1034, %v1001, %v1067
        %v1100 = vsel %vm1035, %v1002, %v1068
        %v1101 = vsel %vm1036, %v1003, %v1069
        %v1102 = vsel %vm1037, %v1004, %v1070
        %v1103 = vsel %vm1038, %v1005, %v1071
        %v1104 = vsel %vm1039, %v1006, %v1072
        %1105 = vst [vmem:[%s299] sm:$0xff] %v1073
        %1106 = vst [vmem:[%s299 + $0x8] sm:$0xff] %v1074
        %1107 = vst [vmem:[%s299 + $0x10] sm:$0xff] %v1075
        %1108 = vst [vmem:[%s299 + $0x18] sm:$0xff] %v1076
        %1109 = vst [vmem:[%s299 + $0x20] sm:$0xff] %v1077
        %1110 = vst [vmem:[%s299 + $0x28] sm:$0xff] %v1078
        %1111 = vst [vmem:[%s299 + $0x30] sm:$0xff] %v1079
        %1112 = vst [vmem:[%s299 + $0x38] sm:$0xff] %v1080
        %1113 = vst [vmem:[%s299 + $0x40] sm:$0xff] %v1081
        %1114 = vst [vmem:[%s299 + $0x48] sm:$0xff] %v1082
        %1115 = vst [vmem:[%s299 + $0x50] sm:$0xff] %v1083
        %1116 = vst [vmem:[%s299 + $0x58] sm:$0xff] %v1084
        %1117 = vst [vmem:[%s299 + $0x60] sm:$0xff] %v1085
        %1118 = vst [vmem:[%s299 + $0x68] sm:$0xff] %v1086
        %1119 = vst [vmem:[%s299 + $0x70] sm:$0xff] %v1087
        %1120 = vst [vmem:[%s299 + $0x78] sm:$0xff] %v1088
        %1121 = vst [vmem:[%s299 + $0x80] sm:$0xff] %v1089
        %1122 = vst [vmem:[%s299 + $0x88] sm:$0xff] %v1090
        %1123 = vst [vmem:[%s299 + $0x90] sm:$0xff] %v1091
        %1124 = vst [vmem:[%s299 + $0x98] sm:$0xff] %v1092
        %1125 = vst [vmem:[%s299 + $0xa0] sm:$0xff] %v1093
        %1126 = vst [vmem:[%s299 + $0xa8] sm:$0xff] %v1094
        %1127 = vst [vmem:[%s299 + $0xb0] sm:$0xff] %v1095
        %1128 = vst [vmem:[%s299 + $0xb8] sm:$0xff] %v1096
        %1129 = vst [vmem:[%s299 + $0xc0] sm:$0xff] %v1097
        %1130 = vst [vmem:[%s299 + $0xc8] sm:$0xff] %v1098
        %1131 = vst [vmem:[%s299 + $0xd0] sm:$0xff] %v1099
        %1132 = vst [vmem:[%s299 + $0xd8] sm:$0xff] %v1100
        %1133 = vst [vmem:[%s299 + $0xe0] sm:$0xff] %v1101
        %1134 = vst [vmem:[%s299 + $0xe8] sm:$0xff] %v1102
        %1135 = vst [vmem:[%s299 + $0xf0] sm:$0xff] %v1103
        %1136 = vst [vmem:[%s299 + $0xf8] sm:$0xff] %v1104
        %s1137 = sand.u32 %s164, 1
        %s1138 = scalar_lea.sflag [#allocation5], %s1137
        %s1139 = sand.u32 %s164, 1
        %s1140 = smul.addr %s1139, 256
        %s1141 = scalar_lea.vmem [#allocation9], %s1140
        // Predicated region
        $region57: #{tpu_custom_call.1} parent=43 // pred_check
          %p1142 = pneg %p174
        $region58: #{tpu_custom_call.1} parent=43 // pred_check_branch
          %1144 = sbr.rel (%p1142) target = $region60
        $region59: #{tpu_custom_call.1} parent=43 // pred_region
          %s1145 = smul.u32 32, %s25
          %s1147 = ssub.s32 4096, 4096
          %1148 = vsyncadd %s1138, %s1147
          %s1149 = smul.addr %s1145, 128
          %s1150 = scalar_lea.hbm %s6, %s1149
          %s1151 = sshll.u32 %s1141, 4
          %s1152 = int_to_ptr.vmem [resolvable:$true] %s1151
          %1157 = dma.vmem_to_hbm [thread:$0]  %s1152, 4096, %s1150, %s1138, 128, 128, 8
        $region60: #{tpu_custom_call.1} parent=43 // pred_fallthru
          _
      $region44: #{tpu_custom_call.1} parent=5 // pred_fallthru
        _
      %p1158 = scmp.le.s32.totalorder 2, %s20
      // Predicated region
      $region61: #{tpu_custom_call.1} parent=5 // pred_check
        %p1159 = pneg %p1158
      $region62: #{tpu_custom_call.1} parent=5 // pred_check_branch
        %1161 = sbr.rel (%p1159) target = $region64
      $region63: #{tpu_custom_call.1} parent=5 // pred_region
        %s1162 = ssub.s32 %s20, 2
        // Predicated region
        $region65: #{tpu_custom_call.1} parent=63 // pred_check
          %p1163 = pneg %p180
        $region66: #{tpu_custom_call.1} parent=63 // pred_check_branch
          %1165 = sbr.rel (%p1163) target = $region68
        $region67: #{tpu_custom_call.1} parent=63 // pred_region
          %s1166 = sand.u32 %s165, 1
          %s1167 = scalar_lea.sflag [#allocation5], %s1166
          %s1168 = sand.u32 %s165, 1
          %s1169 = smul.addr %s1168, 256
          %s1170 = scalar_lea.vmem [#allocation9], %s1169
          %1171 = dma.done %s1167, 4096
        $region68: #{tpu_custom_call.1} parent=63 // pred_fallthru
          _
      $region64: #{tpu_custom_call.1} parent=5 // pred_fallthru
        _
    $region6: #{tpu_custom_call.1} parent=1 // loop_footer
      %s24 = sadd.s32 1, %s20
    $region7: #{tpu_custom_call.1} parent=1 // loop_footer_branch
      %19 = sbr.rel target = $region3
    $region8: #{tpu_custom_call.1} parent=1 // loop_exit
      _
    %1172 = vsyncpa [#allocation4], 1
    %s1173 = scalar_lea.sflag [#allocation4], 1
    %1174 = vsyncpa %s1173, 1
    %1175 = vsyncpa [#allocation7], 1
    %1176 = vsyncpa [#allocation5], 1
    %s1177 = scalar_lea.sflag [#allocation5], 1
    %1178 = vsyncpa %s1177, 1

</llo_original>
